<compile_context>
chip_gen: v6e
topology: v6e:2x2x1
jax: 0.10.0
libtpu: 0.0.40
codegen_flags: <defaults>
</compile_context>

<pallas_src>
import jax
import jax.numpy as jnp
from jax.experimental import pallas as pl
from jax.experimental.pallas import tpu as pltpu

_LANES = 128          # vreg lane width
_SUBLANES = 8         # f32 sublane count
_MAX_BLOCK_ROWS = 512 # (512,128) f32 = 256 KiB/block -> ~1 MiB resident double-buffered


def _identity_copy_kernel(w_ref, o_ref):
    # Identity "forward": pass the parameter tile through unchanged.
    o_ref[...] = w_ref[...]


def _round_up(x: int, m: int) -> int:
    return ((x + m - 1) // m) * m


@jax.jit
def my_2d_parameter_forward(weights: jax.Array) -> jax.Array:
    """Pallas implementation of My_2D_Parameter.forward().

    Args:
      weights: 1-D parameter array of shape (size_in,).

    Returns:
      Array of shape (size_in,), identical to `weights` (identity forward).
    """
    size_in = weights.shape[0]

    # Lane-dense (rows, 128) view, rows padded to a sublane multiple, and then
    # to a multiple of the block height so the grid divides evenly.
    rows = _round_up(max(1, pl.cdiv(size_in, _LANES)), _SUBLANES)
    block_rows = min(_MAX_BLOCK_ROWS, rows)
    rows = _round_up(rows, block_rows)
    padded = rows * _LANES

    flat = weights
    if padded != size_in:
        flat = jnp.pad(weights, (0, padded - size_in))
    w2d = flat.reshape(rows, _LANES)

    grid = (rows // block_rows,)

    out2d = pl.pallas_call(
        _identity_copy_kernel,
        out_shape=jax.ShapeDtypeStruct((rows, _LANES), weights.dtype),
        grid=grid,
        in_specs=[pl.BlockSpec((block_rows, _LANES), lambda i: (i, 0))],
        out_specs=pl.BlockSpec((block_rows, _LANES), lambda i: (i, 0)),
        input_output_aliases={0: 0},
        compiler_params=pltpu.CompilerParams(
            dimension_semantics=("parallel",),
        ),
    )(w2d)

    return out2d.reshape(padded)[:size_in]


class My2DParameterPallas:
    """Mirror of the PyTorch module: owns a zero-initialized 1-D parameter."""

    def __init__(self, size_in: int):
        self.size_in = size_in
        # torch.nn.init.zeros_(self.weights)
        self.weights = jnp.zeros((size_in,), dtype=jnp.float32)

    def __call__(self) -> jax.Array:
        # NOTE: the optimal forward is simply `return self.weights`; the
        # Pallas kernel is kept to exercise the requested kernel path.
        return my_2d_parameter_forward(self.weights)


if __name__ == "__main__":
    key = jax.random.PRNGKey(0)

    # Small shape consistent with the module spec.
    size_in = 32

    # Module path: zero-initialized parameter, identity forward.
    module = My2DParameterPallas(size_in)
    out = jax.block_until_ready(module())
    assert out.shape == (size_in,)
    assert out.dtype == jnp.float32
    assert bool(jnp.all(out == 0.0))

    # Identity check with non-trivial parameter values.
    rand_w = jax.random.normal(key, (size_in,), dtype=jnp.float32)
    out_rand = jax.block_until_ready(my_2d_parameter_forward(rand_w))
    assert bool(jnp.allclose(out_rand, rand_w))

    # Identity check on a size that is not a multiple of 128 (exercises the
    # lane-padding + slice-back path).
    key2 = jax.random.split(key)[0]
    rand_w2 = jax.random.normal(key2, (300,), dtype=jnp.float32)
    out_rand2 = jax.block_until_ready(my_2d_parameter_forward(rand_w2))
    assert out_rand2.shape == (300,)
    assert bool(jnp.allclose(out_rand2, rand_w2))

    print("KERNEL_OK")
</pallas_src>

<mosaic_0001>
module attributes {stable_mosaic.version = 11 : i64} {
  func.func @_identity_copy_kernel(%arg0: i32, %arg1: memref<8x128xf32, #tpu.memory_space<vmem>>, %arg2: memref<8x128xf32, #tpu.memory_space<vmem>>) attributes {dimension_semantics = [#tpu.dimension_semantics<parallel>], iteration_bounds = array<i64: 1>, scalar_prefetch = 0 : i64, scratch_operands = 0 : i64, tpu.core_type = #tpu.core_type<tc>, window_params = [{transform_indices = @transform_0, window_bounds = array<i64: 8, 128>}, {transform_indices = @transform_1, window_bounds = array<i64: 8, 128>}]} {
    %c0 = arith.constant 0 : index
    %c0_0 = arith.constant 0 : index
    %0 = vector.load %arg1[%c0, %c0_0] : memref<8x128xf32, #tpu.memory_space<vmem>>, vector<8x128xf32>
    %c0_1 = arith.constant 0 : index
    %c0_2 = arith.constant 0 : index
    %1 = vector.load %arg2[%c0_1, %c0_2] : memref<8x128xf32, #tpu.memory_space<vmem>>, vector<8x128xf32>
    tpu.vector_store %arg2[%c0_1, %c0_2], %0 {strides = array<i32>} : memref<8x128xf32, #tpu.memory_space<vmem>>, vector<8x128xf32>,
    return
  }
  func.func @transform_0(%arg0: i32) -> (i32, i32) {
    %c0_i32 = arith.constant 0 : i32
    %c0_i32_0 = arith.constant 0 : i32
    return %arg0, %c0_i32 : i32, i32
  }
  func.func @transform_1(%arg0: i32) -> (i32, i32) {
    %c0_i32 = arith.constant 0 : i32
    %c0_i32_0 = arith.constant 0 : i32
    return %arg0, %c0_i32 : i32, i32
  }
}

</mosaic_0001>

<llo_original>
// kernel: my_2d_parameter_forward.1
$region0: #{my_2d_parameter_forward.1}
  #allocation0 [shape = 'u32[]', space=smem, size = 0x4, offset = 0x4, fixed_abs, tag = 'smem constant byte address 0x4 - core index']
  #allocation1 [shape = 'u32[144,128]{1,0:T(1,128)}', space=vmem, size = 0x12000, scoped, tag = 'internal scratch']
  %s0 = inlined_call_operand.vmem [shape: f32[8,128], index: 0, kind: input, shape index: {}, may-alias: {0,1}]
  %s1 = inlined_call_operand.vmem [shape: f32[8,128], index: 1, kind: output, shape index: {}, may-alias: {0,1}]
  %s2 = sld [smem:[#allocation0]]
  $region14: #{my_2d_parameter_forward.1} parent=0
    _
  %s4 = ssub.s32 1, %s2
  %s5 = scalar_select 0, %s4, %s2
  // Predicated region
  $region2: #{my_2d_parameter_forward.1} parent=0 // pred_check
    _
  $region3: #{my_2d_parameter_forward.1} parent=0 // pred_check_branch
    %7 = sbr.rel (0) target = $region5
  $region4: #{my_2d_parameter_forward.1} parent=0 // pred_region
    _
  $region5: #{my_2d_parameter_forward.1} parent=0 // pred_fallthru
    _
  %v8 = vld [vmem:[%s0] sm:$0xff]
  %9 = vst [vmem:[%s1] sm:$0xff] %v8
  // Predicated region
  $region6: #{my_2d_parameter_forward.1} parent=0 // pred_check
    _
  $region7: #{my_2d_parameter_forward.1} parent=0 // pred_check_branch
    %11 = sbr.rel (0) target = $region9
  $region8: #{my_2d_parameter_forward.1} parent=0 // pred_region
    _
  $region9: #{my_2d_parameter_forward.1} parent=0 // pred_fallthru
    _
  // Predicated region
  $region10: #{my_2d_parameter_forward.1} parent=0 // pred_check
    _
  $region11: #{my_2d_parameter_forward.1} parent=0 // pred_check_branch
    %13 = sbr.rel (0) target = $region13
  $region12: #{my_2d_parameter_forward.1} parent=0 // pred_region
    _
  $region13: #{my_2d_parameter_forward.1} parent=0 // pred_fallthru
    _

</llo_original>
